<compile_context>
chip_gen: v5e
topology: v5e:2x2
jax: 0.10.0
libtpu: 0.0.40
codegen_flags: <defaults>
</compile_context>

<pallas_src>
import math

import jax
import jax.numpy as jnp
from jax import lax
from jax.experimental import pallas as pl
from jax.experimental.pallas import tpu as pltpu

LN_EPS = 1e-12


def _round_up(x: int, m: int) -> int:
    return ((x + m - 1) // m) * m


def _feature_resizer_kernel(x_ref, w_ref, p_ref, o_ref):
    # x_ref: (TM, C1), w_ref: (C1, C2), p_ref: (3, C2) = [bias; gamma; beta],
    # o_ref: (TM, C2).
    # Linear: native-dtype operands on the MXU, f32 accumulation.
    y = jnp.dot(x_ref[...], w_ref[...], preferred_element_type=jnp.float32)
    y = y + p_ref[0:1, :].astype(jnp.float32)

    # LayerNorm over the feature axis (biased variance, eps=1e-12, like nn.LayerNorm).
    mean = jnp.mean(y, axis=-1, keepdims=True)
    centered = y - mean
    var = jnp.mean(centered * centered, axis=-1, keepdims=True)
    out = centered * lax.rsqrt(var + LN_EPS)
    out = out * p_ref[1:2, :].astype(jnp.float32) + p_ref[2:3, :].astype(jnp.float32)

    # Dropout: identity in inference.
    # TODO(synk): training-mode dropout would use pltpu.prng_seed / prng_random_bits.
    o_ref[...] = out.astype(o_ref.dtype)


def _choose_row_tile(n, c1, c2, *, x_itemsize, w_itemsize, out_itemsize,
                     budget_bytes, target=1024):
    """Largest row tile that fits the VMEM budget (dtype-aware, counts the f32
    epilogue temporaries), capped so there are >= 2 and preferably an even number
    of grid programs (v7x has two TensorCores)."""
    # VMEM-layout-rounded feature dims for the estimate.
    c1t = _round_up(c1, 128)
    c2t = _round_up(c2, 128)

    def vmem_need(tm):
        streamed = 2 * tm * c1t * x_itemsize + 2 * tm * c2t * out_itemsize  # double-buffered x/out
        resident = c1t * c2t * w_itemsize + 8 * c2t * 4                     # Buffered(1) weight + packed params
        f32_tmps = 3 * tm * c2t * 4                                         # y / centered / normalized
        return streamed + resident + f32_tmps

    tm = max(8, _round_up(target, 8))
    while tm > 8 and vmem_need(tm) > budget_bytes:
        tm //= 2
    tm = max(8, (tm // 8) * 8)
    # Never larger than the (8-rounded) total row count.
    tm = min(tm, _round_up(max(n, 1), 8))
    # Prefer >= 2 grid programs when there is enough work.
    if n > 8:
        tm = min(tm, max(8, _round_up(pl.cdiv(n, 2), 8)))
    # Best-effort: keep the number of programs even so both v7x TCs stay busy.
    g = pl.cdiv(n, tm)
    if g > 1 and g % 2 == 1:
        tm = max(8, _round_up(pl.cdiv(n, g + 1), 8))
    return tm


def feature_resizer(x, weight, bias, ln_gamma, ln_beta, *, row_tile: int | None = None):
    """x: (..., C1). weight: PyTorch-style (C2, C1). Returns (..., C2)."""
    orig_lead = x.shape[:-1]
    c1 = x.shape[-1]
    c2 = weight.shape[0]
    n = math.prod(orig_lead)

    # Generation-aware VMEM limit / budget (v7x: 64 MiB per TC; v5e/v6e: 128 MiB).
    try:
        info = pltpu.get_tpu_info()
        vmem_cap = int(getattr(info, "vmem_capacity_bytes", 64 * 1024 * 1024))
    except Exception:  # pragma: no cover - conservative fallback
        vmem_cap = 64 * 1024 * 1024
    vmem_limit = min((vmem_cap * 3) // 4, 96 * 1024 * 1024)   # ~48 MiB on v7x, ~96 MiB on v5e/v6e
    budget = (vmem_limit * 3) // 4                            # headroom for compiler scratch

    x_itemsize = jnp.dtype(x.dtype).itemsize
    w_itemsize = jnp.dtype(weight.dtype).itemsize

    tm = row_tile if row_tile is not None else _choose_row_tile(
        n, c1, c2, x_itemsize=x_itemsize, w_itemsize=w_itemsize,
        out_itemsize=x_itemsize, budget_bytes=budget)
    tm = max(8, _round_up(tm, 8))
    grid = pl.cdiv(max(n, 1), tm)

    # No padding / slicing of the big operands: just a free reshape of x, a small
    # one-time transpose of the weight, and a tiny (3, C2) packed parameter block.
    x2 = x.reshape(n, c1)
    w_t = weight.T                                            # (C1, C2)
    params = jnp.stack([bias.astype(jnp.float32),
                        ln_gamma.astype(jnp.float32),
                        ln_beta.astype(jnp.float32)])         # (3, C2)

    cost = pl.CostEstimate(
        flops=2 * n * c1 * c2,
        transcendentals=n,                                    # one rsqrt per row
        bytes_accessed=(n * c1 + n * c2) * x_itemsize + c1 * c2 * w_itemsize + 3 * c2 * 4,
    )

    def _invariant_spec(block_shape):
        # Grid-invariant operand: single buffer (no wasted second copy in VMEM).
        try:
            return pl.BlockSpec(block_shape, lambda i: (0, 0), pipeline_mode=pl.Buffered(1))
        except Exception:  # pragma: no cover - older jax without pipeline_mode
            return pl.BlockSpec(block_shape, lambda i: (0, 0))

    # TODO(synk): for very large C1*C2 (weight block exceeding the VMEM budget,
    # especially on v7x's 64 MiB), add a K-tiling fallback (grid axis over C1,
    # f32 accumulator scratch with pl.when init/finalize). Not needed at
    # FeatureResizer-scale projections.
    out = pl.pallas_call(
        _feature_resizer_kernel,
        out_shape=jax.ShapeDtypeStruct((n, c2), x.dtype),
        grid=(grid,),
        in_specs=[
            pl.BlockSpec((tm, c1), lambda i: (i, 0)),   # x rows (streamed, double-buffered)
            _invariant_spec((c1, c2)),                  # weight (resident, single buffer)
            _invariant_spec((3, c2)),                   # packed [bias; gamma; beta]
        ],
        out_specs=pl.BlockSpec((tm, c2), lambda i: (i, 0)),
        compiler_params=pltpu.CompilerParams(
            dimension_semantics=("parallel",),
            vmem_limit_bytes=vmem_limit,
        ),
        cost_estimate=cost,
    )(x2, w_t, params)

    return out.reshape(*orig_lead, c2)


def _reference(x, weight, bias, gamma, beta):
    y = jnp.einsum("...i,oi->...o", x, weight) + bias
    mean = jnp.mean(y, axis=-1, keepdims=True)
    var = jnp.mean((y - mean) ** 2, axis=-1, keepdims=True)
    return (y - mean) / jnp.sqrt(var + LN_EPS) * gamma + beta


if __name__ == "__main__":
    # Small shapes consistent with the module: (B, S, C1) embeddings -> (B, S, C2).
    B, S, C1, C2 = 2, 8, 32, 64

    key = jax.random.PRNGKey(0)
    kx, kw, kb = jax.random.split(key, 3)

    x = jax.random.normal(kx, (B, S, C1), dtype=jnp.float32)

    # Deterministic parameter init (PyTorch Linear-like uniform bounds; synthetic).
    bound = 1.0 / math.sqrt(C1)
    weight = jax.random.uniform(kw, (C2, C1), minval=-bound, maxval=bound, dtype=jnp.float32)
    bias = jax.random.uniform(kb, (C2,), minval=-bound, maxval=bound, dtype=jnp.float32)
    ln_gamma = jnp.ones((C2,), dtype=jnp.float32)
    ln_beta = jnp.zeros((C2,), dtype=jnp.float32)

    out = feature_resizer(x, weight, bias, ln_gamma, ln_beta)
    out = jax.block_until_ready(out)

    ref = _reference(x, weight, bias, ln_gamma, ln_beta)
    assert out.shape == (B, S, C2), out.shape
    max_err = float(jnp.max(jnp.abs(out - ref)))
    assert jnp.allclose(out, ref, atol=1e-4, rtol=1e-4), max_err

    print("KERNEL_OK")
</pallas_src>

<mosaic_0001>
module attributes {stable_mosaic.version = 11 : i64} {
  func.func @_feature_resizer_kernel(%arg0: i32, %arg1: memref<8x32xf32, #tpu.memory_space<vmem>>, %arg2: memref<32x64xf32, #tpu.memory_space<vmem>>, %arg3: memref<3x64xf32, #tpu.memory_space<vmem>>, %arg4: memref<8x64xf32, #tpu.memory_space<vmem>>) attributes {dimension_semantics = [#tpu.dimension_semantics<parallel>], iteration_bounds = array<i64: 2>, scalar_prefetch = 0 : i64, scratch_operands = 0 : i64, tpu.core_type = #tpu.core_type<tc>, window_params = [{transform_indices = @transform_0, window_bounds = array<i64: 8, 32>}, {pipeline_mode = #tpu.pipeline_mode<synchronous>, transform_indices = @transform_1, window_bounds = array<i64: 32, 64>}, {pipeline_mode = #tpu.pipeline_mode<synchronous>, transform_indices = @transform_2, window_bounds = array<i64: 3, 64>}, {transform_indices = @transform_3, window_bounds = array<i64: 8, 64>}]} {
    %c0 = arith.constant 0 : index
    %c0_0 = arith.constant 0 : index
    %0 = vector.load %arg1[%c0, %c0_0] : memref<8x32xf32, #tpu.memory_space<vmem>>, vector<8x32xf32>
    %c0_1 = arith.constant 0 : index
    %c0_2 = arith.constant 0 : index
    %1 = vector.load %arg2[%c0_1, %c0_2] : memref<32x64xf32, #tpu.memory_space<vmem>>, vector<32x64xf32>
    %cst = arith.constant dense<0.000000e+00> : vector<8x64xf32>
    %2 = tpu.matmul %0, %1, %cst {dimension_numbers = #tpu.dot_dimension_numbers<[1], [0], [0], [1], [0, 0, 1, 1], [], []>} : vector<8x32xf32>, vector<32x64xf32>, vector<8x64xf32> -> vector<8x64xf32>
    %c0_3 = arith.constant 0 : index
    %c0_4 = arith.constant 0 : index
    %3 = vector.load %arg3[%c0_3, %c0_4] : memref<3x64xf32, #tpu.memory_space<vmem>>, vector<1x64xf32>
    %4 = vector.broadcast %3 : vector<1x64xf32> to vector<8x64xf32>
    %5 = arith.addf %2, %4 : vector<8x64xf32>
    %cst_5 = arith.constant dense<0.000000e+00> : vector<8xf32>
    %6 = vector.multi_reduction <add>, %5, %cst_5 [1] : vector<8x64xf32> to vector<8xf32>
    %7 = vector.shape_cast %6 : vector<8xf32> to vector<8x1xf32>
    %cst_6 = arith.constant 6.400000e+01 : f32
    %8 = vector.broadcast %cst_6 : f32 to vector<8x1xf32>
    %9 = arith.divf %7, %8 : vector<8x1xf32>
    %10 = vector.broadcast %9 : vector<8x1xf32> to vector<8x64xf32>
    %11 = arith.subf %5, %10 : vector<8x64xf32>
    %12 = arith.mulf %11, %11 : vector<8x64xf32>
    %cst_7 = arith.constant dense<0.000000e+00> : vector<8xf32>
    %13 = vector.multi_reduction <add>, %12, %cst_7 [1] : vector<8x64xf32> to vector<8xf32>
    %14 = vector.shape_cast %13 : vector<8xf32> to vector<8x1xf32>
    %cst_8 = arith.constant 6.400000e+01 : f32
    %15 = vector.broadcast %cst_8 : f32 to vector<8x1xf32>
    %16 = arith.divf %14, %15 : vector<8x1xf32>
    %cst_9 = arith.constant 9.99999996E-13 : f32
    %17 = vector.broadcast %cst_9 : f32 to vector<8x1xf32>
    %18 = arith.addf %16, %17 : vector<8x1xf32>
    %19 = math.rsqrt %18 : vector<8x1xf32>
    %20 = vector.broadcast %19 : vector<8x1xf32> to vector<8x64xf32>
    %21 = arith.mulf %11, %20 : vector<8x64xf32>
    %c1 = arith.constant 1 : index
    %c0_10 = arith.constant 0 : index
    %22 = vector.load %arg3[%c1, %c0_10] : memref<3x64xf32, #tpu.memory_space<vmem>>, vector<1x64xf32>
    %23 = vector.broadcast %22 : vector<1x64xf32> to vector<8x64xf32>
    %24 = arith.mulf %21, %23 : vector<8x64xf32>
    %c2 = arith.constant 2 : index
    %c0_11 = arith.constant 0 : index
    %25 = vector.load %arg3[%c2, %c0_11] : memref<3x64xf32, #tpu.memory_space<vmem>>, vector<1x64xf32>
    %26 = vector.broadcast %25 : vector<1x64xf32> to vector<8x64xf32>
    %27 = arith.addf %24, %26 : vector<8x64xf32>
    %c0_12 = arith.constant 0 : index
    %c0_13 = arith.constant 0 : index
    %28 = vector.load %arg4[%c0_12, %c0_13] : memref<8x64xf32, #tpu.memory_space<vmem>>, vector<8x64xf32>
    tpu.vector_store %arg4[%c0_12, %c0_13], %27 {strides = array<i32>} : memref<8x64xf32, #tpu.memory_space<vmem>>, vector<8x64xf32>,
    return
  }
  func.func @transform_0(%arg0: i32) -> (i32, i32) {
    %c0_i32 = arith.constant 0 : i32
    %c0_i32_0 = arith.constant 0 : i32
    return %arg0, %c0_i32 : i32, i32
  }
  func.func @transform_1(%arg0: i32) -> (i32, i32) {
    %c0_i32 = arith.constant 0 : i32
    %c0_i32_0 = arith.constant 0 : i32
    %c0_i32_1 = arith.constant 0 : i32
    return %c0_i32, %c0_i32_0 : i32, i32
  }
  func.func @transform_2(%arg0: i32) -> (i32, i32) {
    %c0_i32 = arith.constant 0 : i32
    %c0_i32_0 = arith.constant 0 : i32
    %c0_i32_1 = arith.constant 0 : i32
    return %c0_i32, %c0_i32_0 : i32, i32
  }
  func.func @transform_3(%arg0: i32) -> (i32, i32) {
    %c0_i32 = arith.constant 0 : i32
    %c0_i32_0 = arith.constant 0 : i32
    return %arg0, %c0_i32 : i32, i32
  }
}

</mosaic_0001>

<llo_original>
// kernel: tpu_custom_call.1
$region0: #{tpu_custom_call.1}
  #allocation0 [shape = 'u32[]', space=smem, size = 0x4, offset = 0x4, fixed_abs, tag = 'smem constant byte address 0x4 - core index']
  #allocation1 [shape = 'u32[72,128]{1,0:T(1,128)}', space=vmem, size = 0x9000, scoped, tag = 'internal scratch']
  %s0 = inlined_call_operand.hbm [shape: f32[16,32], index: 0, kind: input, shape index: {}]
  %s1 = inlined_call_operand.hbm [shape: f32[32,64], index: 1, kind: input, shape index: {}]
  %s2 = inlined_call_operand.hbm [shape: f32[3,64], index: 2, kind: input, shape index: {}]
  %s3 = inlined_call_operand.hbm [shape: f32[16,64], index: 3, kind: output, shape index: {}]
  %s4 = sld [smem:[#allocation0]]
  $region57: #{tpu_custom_call.1} parent=0
    _
  %s6 = ssub.s32 1, %s4
  %s7 = scalar_select 0, %s6, %s4
  $region1: #{tpu_custom_call.1} parent=0
    #allocation2 [shape = 'u8[8192]{0}', space=vmem, size = 0x2000, scoped, tag = 'input window, operand 0']
    #allocation3 [shape = 's32[2]{0}', space=sflag, size = 0x8, scoped, tag = 'scoped memory for tpu_custom_call.1']
    #allocation4 [shape = 's32[2]{0}', space=sflag, size = 0x8, scoped, tag = 'scoped memory for tpu_custom_call.1']
    #allocation5 [shape = 'u8[16384]{0}', space=vmem, size = 0x4000, scoped, tag = 'input window, operand 1, single buffered']
    #allocation6 [shape = 's32[1]{0}', space=sflag, size = 0x4, scoped, tag = 'scoped memory for tpu_custom_call.1']
    #allocation7 [shape = 'u8[2048]{0}', space=vmem, size = 0x800, scoped, tag = 'input window, operand 2, single buffered']
    #allocation8 [shape = 'u8[8192]{0}', space=vmem, size = 0x2000, scoped, tag = 'output window, operand 0']
    %8 = vsyncpa [#allocation3], 0
    %s9 = scalar_lea.sflag [#allocation3], 1
    %10 = vsyncpa %s9, 0
    %11 = vsyncpa [#allocation6], 0
    %12 = vsyncpa [#allocation4], 0
    %s13 = scalar_lea.sflag [#allocation4], 1
    %14 = vsyncpa %s13, 0
    loop: start=0, step=1, limit=4
    $region2: #{tpu_custom_call.1} parent=1 // loop_pre_header
      _
    $region3: #{tpu_custom_call.1} parent=1 // loop_header
      %s16 = sphi 0, %s20
      %p17 = scmp.ge.s32.totalorder %s16, 4
      %s26 = sphi 0, %s28
      %s29 = sphi 0, %s26
      %s30 = sphi 0, %s29
      %s46 = sphi 0, %s30
      %s50 = sphi 0, %s50
      %s52 = sphi 0, %s50
      %s53 = sphi 0, %s52
      %s67 = sphi 0, %s53
      %s71 = sphi 0, %s71
      %s73 = sphi 0, %s71
      %s74 = sphi 0, %s73
      %s88 = sphi 0, %s74
      %s94 = sphi 0, %s96
      %s97 = sphi 0, %s94
      %s98 = sphi 0, %s97
      %s114 = sphi 0, %s98
    $region4: #{tpu_custom_call.1} parent=1 // loop_header_branch
      %19 = sbr.rel (%p17) target = $region8
    $region5: #{tpu_custom_call.1} parent=1 // loop_body
      %s21 = ssub.s32 %s16, 1
      %s22 = ssub.s32 %s16, 2
      %s23 = sadd.s32 %s16, 1
      %s24 = ssub.s32 %s16, %s23
      %p25 = scmp.eq.s32.totalorder %s24, 0
      %s27 = sadd.s32 %s26, 1
      %s28 = scalar_select %p25, %s26, %s27
      %p31 = pneg %p25
      %p32 = scmp.eq.s32.totalorder %s16, 1
      %p33 = por %p31, %p32
      %p34 = scmp.ne.s32.totalorder %s26, %s29
      %p35 = scmp.eq.s32.totalorder %s16, 0
      %p36 = por %p34, %p35
      %p37 = scmp.ne.s32.totalorder %s26, %s29
      %p38 = scmp.eq.s32.totalorder %s21, 1
      %p39 = por %p37, %p38
      %p40 = scmp.ne.s32.totalorder %s29, %s30
      %p41 = scmp.eq.s32.totalorder %s21, 0
      %p42 = por %p40, %p41
      %p43 = scmp.ne.s32.totalorder %s29, %s30
      %p44 = scmp.eq.s32.totalorder %s22, 1
      %p45 = por %p43, %p44
      %p47 = scmp.ne.s32.totalorder %s30, %s46
      %p48 = scmp.eq.s32.totalorder %s22, 0
      %p49 = por %p47, %p48
      %s51 = sadd.s32 %s50, 1
      %p54 = scmp.eq.s32.totalorder %s16, 1
      %p55 = scmp.ne.s32.totalorder %s50, %s52
      %p56 = scmp.eq.s32.totalorder %s16, 0
      %p57 = por %p55, %p56
      %p58 = scmp.ne.s32.totalorder %s50, %s52
      %p59 = scmp.eq.s32.totalorder %s21, 1
      %p60 = por %p58, %p59
      %p61 = scmp.ne.s32.totalorder %s52, %s53
      %p62 = scmp.eq.s32.totalorder %s21, 0
      %p63 = por %p61, %p62
      %p64 = scmp.ne.s32.totalorder %s52, %s53
      %p65 = scmp.eq.s32.totalorder %s22, 1
      %p66 = por %p64, %p65
      %p68 = scmp.ne.s32.totalorder %s53, %s67
      %p69 = scmp.eq.s32.totalorder %s22, 0
      %p70 = por %p68, %p69
      %s72 = sadd.s32 %s71, 1
      %p75 = scmp.eq.s32.totalorder %s16, 1
      %p76 = scmp.ne.s32.totalorder %s71, %s73
      %p77 = scmp.eq.s32.totalorder %s16, 0
      %p78 = por %p76, %p77
      %p79 = scmp.ne.s32.totalorder %s71, %s73
      %p80 = scmp.eq.s32.totalorder %s21, 1
      %p81 = por %p79, %p80
      %p82 = scmp.ne.s32.totalorder %s73, %s74
      %p83 = scmp.eq.s32.totalorder %s21, 0
      %p84 = por %p82, %p83
      %p85 = scmp.ne.s32.totalorder %s73, %s74
      %p86 = scmp.eq.s32.totalorder %s22, 1
      %p87 = por %p85, %p86
      %p89 = scmp.ne.s32.totalorder %s74, %s88
      %p90 = scmp.eq.s32.totalorder %s22, 0
      %p91 = por %p89, %p90
      %s92 = ssub.s32 %s16, %s23
      %p93 = scmp.eq.s32.totalorder %s92, 0
      %s95 = sadd.s32 %s94, 1
      %s96 = scalar_select %p93, %s94, %s95
      %p99 = pneg %p93
      %p100 = scmp.eq.s32.totalorder %s16, 1
      %p101 = por %p99, %p100
      %p102 = scmp.ne.s32.totalorder %s94, %s97
      %p103 = scmp.eq.s32.totalorder %s16, 0
      %p104 = por %p102, %p103
      %p105 = scmp.ne.s32.totalorder %s94, %s97
      %p106 = scmp.eq.s32.totalorder %s21, 1
      %p107 = por %p105, %p106
      %p108 = scmp.ne.s32.totalorder %s97, %s98
      %p109 = scmp.eq.s32.totalorder %s21, 0
      %p110 = por %p108, %p109
      %p111 = scmp.ne.s32.totalorder %s97, %s98
      %p112 = scmp.eq.s32.totalorder %s22, 1
      %p113 = por %p111, %p112
      %p115 = scmp.ne.s32.totalorder %s98, %s114
      %p116 = scmp.eq.s32.totalorder %s22, 0
      %p117 = por %p115, %p116
      %p118 = scmp.le.s32.totalorder 1, %s16
      %p119 = scmp.lt.s32.totalorder %s16, 3
      %p120 = pnand %p118, %p119
      %p121 = pneg %p120
      // Predicated region
      $region9: #{tpu_custom_call.1} parent=5 // pred_check
        _
      $region10: #{tpu_custom_call.1} parent=5 // pred_check_branch
        %123 = sbr.rel (%p120) target = $region12
      $region11: #{tpu_custom_call.1} parent=5 // pred_region
        %s124 = ssub.s32 %s16, 1
        // Predicated region
        $region13: #{tpu_custom_call.1} parent=11 // pred_check
          %p125 = pneg %p63
        $region14: #{tpu_custom_call.1} parent=11 // pred_check_branch
          %127 = sbr.rel (%p125) target = $region16
        $region15: #{tpu_custom_call.1} parent=11 // pred_region
          %129 = vsyncadd [#allocation6], 0
          %s130 = sshll.u32 %s1, 4
          %s131 = int_to_ptr.hbm [resolvable:$true] %s130
          %s132 = sshll.u32 [#allocation5], 4
          %s133 = int_to_ptr.vmem [resolvable:$true] %s132
          %138 = dma.hbm_to_vmem [thread:$0]  %s131, 512, %s133, [#allocation6], 128, 128, 8
        $region16: #{tpu_custom_call.1} parent=11 // pred_fallthru
          _
        // Predicated region
        $region17: #{tpu_custom_call.1} parent=11 // pred_check
          %p139 = pneg %p84
        $region18: #{tpu_custom_call.1} parent=11 // pred_check_branch
          %141 = sbr.rel (%p139) target = $region20
        $region19: #{tpu_custom_call.1} parent=11 // pred_region
          %143 = vsyncadd [#allocation6], 0
          %s145 = sshll.u32 %s2, 4
          %s146 = int_to_ptr.hbm [resolvable:$true] %s145
          %s147 = sshll.u32 [#allocation7], 4
          %s148 = int_to_ptr.vmem [resolvable:$true] %s147
          %150 = dma.hbm_to_vmem [thread:$0]  %s146, 64, %s148, [#allocation6]
        $region20: #{tpu_custom_call.1} parent=11 // pred_fallthru
          _
      $region12: #{tpu_custom_call.1} parent=5 // pred_fallthru
        _
      %p151 = scmp.lt.s32.totalorder %s16, 2
      // Predicated region
      $region21: #{tpu_custom_call.1} parent=5 // pred_check
        %p152 = pneg %p151
      $region22: #{tpu_custom_call.1} parent=5 // pred_check_branch
        %154 = sbr.rel (%p152) target = $region24
      $region23: #{tpu_custom_call.1} parent=5 // pred_region
        // Predicated region
        $region25: #{tpu_custom_call.1} parent=23 // pred_check
          %p155 = pneg %p36
        $region26: #{tpu_custom_call.1} parent=23 // pred_check_branch
          %157 = sbr.rel (%p155) target = $region28
        $region27: #{tpu_custom_call.1} parent=23 // pred_region
          %s158 = sand.u32 %s26, 1
          %s159 = scalar_lea.sflag [#allocation3], %s158
          %s160 = sand.u32 %s26, 1
          %s161 = smul.addr %s160, 8
          %s162 = scalar_lea.vmem [#allocation2], %s161
          %164 = vsyncadd %s159, 0
          %s165 = smul.addr %s16, 8
          %s166 = scalar_lea.hbm %s0, %s165
          %s168 = sshll.u32 %s166, 4
          %s169 = int_to_ptr.hbm [resolvable:$true] %s168
          %s170 = sshll.u32 %s162, 4
          %s171 = int_to_ptr.vmem [resolvable:$true] %s170
          %173 = dma.hbm_to_vmem [thread:$0]  %s169, 128, %s171, %s159
        $region28: #{tpu_custom_call.1} parent=23 // pred_fallthru
          _
      $region24: #{tpu_custom_call.1} parent=5 // pred_fallthru
        _
      %p174 = scmp.le.s32.totalorder 1, %s16
      %p175 = scmp.lt.s32.totalorder %s16, 3
      %p176 = pnand %p174, %p175
      %p177 = pneg %p176
      // Predicated region
      $region29: #{tpu_custom_call.1} parent=5 // pred_check
        _
      $region30: #{tpu_custom_call.1} parent=5 // pred_check_branch
        %179 = sbr.rel (%p176) target = $region32
      $region31: #{tpu_custom_call.1} parent=5 // pred_region
        %s180 = ssub.s32 %s16, 1
        %s181 = sand.u32 %s29, 1
        %s182 = scalar_lea.sflag [#allocation3], %s181
        %s183 = sand.u32 %s29, 1
        %s184 = smul.addr %s183, 8
        %s185 = scalar_lea.vmem [#allocation2], %s184
        // Predicated region
        $region33: #{tpu_custom_call.1} parent=31 // pred_check
          %p186 = pneg %p42
        $region34: #{tpu_custom_call.1} parent=31 // pred_check_branch
          %188 = sbr.rel (%p186) target = $region36
        $region35: #{tpu_custom_call.1} parent=31 // pred_region
          %190 = dma.done %s182, 128
        $region36: #{tpu_custom_call.1} parent=31 // pred_fallthru
          _
        // Predicated region
        $region37: #{tpu_custom_call.1} parent=31 // pred_check
          %p191 = pneg %p63
        $region38: #{tpu_custom_call.1} parent=31 // pred_check_branch
          %193 = sbr.rel (%p191) target = $region40
        $region39: #{tpu_custom_call.1} parent=31 // pred_region
          %195 = dma.done [#allocation6], 512
        $region40: #{tpu_custom_call.1} parent=31 // pred_fallthru
          _
        // Predicated region
        $region41: #{tpu_custom_call.1} parent=31 // pred_check
          %p196 = pneg %p84
        $region42: #{tpu_custom_call.1} parent=31 // pred_check_branch
          %198 = sbr.rel (%p196) target = $region44
        $region43: #{tpu_custom_call.1} parent=31 // pred_region
          %200 = dma.done [#allocation6], 64
        $region44: #{tpu_custom_call.1} parent=31 // pred_fallthru
          _
        %s201 = sand.u32 %s29, 1
        %s202 = scalar_lea.sflag [#allocation3], %s201
        %s203 = sand.u32 %s29, 1
        %s204 = smul.addr %s203, 8
        %s205 = scalar_lea.vmem [#allocation2], %s204
        %p206 = pneg %p42
        %p207 = pneg %p39
        %p208 = pneg %p63
        %p209 = pneg %p60
        %p210 = pneg %p84
        %p211 = pneg %p81
        %p212 = pneg %p110
        %p213 = pneg %p107
        %s214 = sand.u32 %s97, 1
        %s215 = scalar_lea.sflag [#allocation4], %s214
        %s216 = sand.u32 %s97, 1
        %s217 = smul.addr %s216, 8
        %s218 = scalar_lea.vmem [#allocation8], %s217
        %v219 = vld [vmem:[%s185] sm:$0xff]
        %v220 = vld [vmem:[#allocation5] sm:$0xff]
        %v221 = vld [vmem:[#allocation5 + $0x8] sm:$0xff]
        %v222 = vld [vmem:[#allocation5 + $0x10] sm:$0xff]
        %v223 = vld [vmem:[#allocation5 + $0x18] sm:$0xff]
        %v224 = vld [vmem:[#allocation7] sm:$0x1]
        %v225 = vperm.slane %v224, 0
        %vm226 = vcmask 261120
        %v228 = vsel %vm226, %v219, 0
        %230 = vmatpush.msra.mxu0 0.0
        %231 = vmatpush.msra.mxu0 0.0
        %232 = vmatpush.msra.mxu0 0.0
        %233 = vmatpush.msra.mxu0 0.0
        %234 = vmatpush.msra.mxu0 0.0
        %235 = vmatpush.msra.mxu0 0.0
        %236 = vmatpush.msra.mxu0 0.0
        %237 = vmatpush.msra.mxu0 0.0
        %238 = vmatpush.msra.mxu0 0.0
        %239 = vmatpush.msra.mxu0 0.0
        %240 = vmatpush.msra.mxu0 0.0
        %241 = vmatpush.msra.mxu0 0.0
        %242 = vmatpush.msra.mxu0 %v223
        %243 = vmatpush.msra.mxu0 %v222
        %244 = vmatpush.msra.mxu0 %v221
        %245 = vmatpush.msra.mxu0 %v220
        %246 = vmatmul.f32.gmra.mxu0 %v228
        %v247 = vpop.f32.mrf.mxu0
        %v248 = vadd.f32 %v225, %v247
        %249 = vdwg.mxu0
        %vm250 = vcmask 523264
        %v251 = vsel %vm250, %v248, 0.0
        %252 = vadd.xlane.f32.xlu0 %v251
        %v253 = vpop.xlane.xlu0 %252
        %v254 = vrcp.pop 64.0
        %v255 = vmul.f32 64.0, %v254
        %v256 = vsub.f32 1.0, %v255
        %v257 = vmul.f32 %v254, %v256
        %v258 = vadd.f32 %v254, %v257
        %vm259 = vweird.f32 %v254
        %v260 = vsel %vm259, %v254, %v258
        %v261 = vmul.f32 %v253, %v260
        %v262 = vsub.f32 %v248, %v261
        %v263 = vmul.f32 %v262, %v262
        %v264 = vsel %vm250, %v263, 0.0
        %265 = vadd.xlane.f32.xlu0 %v264
        %v266 = vpop.xlane.xlu0 %265
        %v267 = vmul.f32 %v266, %v260
        %v268 = vadd.f32 %v267, 1e-12
        %v269 = vrsqrt.pop %v268
        %v270 = vmul.f32 %v269, %v268
        %v271 = vmul.f32 %v270, %v269
        %v272 = vmul.f32 0.5, %v271
        %v273 = vsub.f32 1.5, %v272
        %v274 = vmul.f32 %v269, %v273
        %vm275 = vweird.f32 %v268
        %vm276 = vweird.f32 %v269
        %vm277 = vmor %vm275, %vm276
        %v278 = vsel %vm277, %v269, %v274
        %v279 = vmul.f32 %v262, %v278
        %v280 = vld [vmem:[#allocation7 + $0x1] sm:$0x1]
        %v281 = vperm.slane %v280, 0
        %v282 = vmul.f32 %v279, %v281
        %v283 = vld [vmem:[#allocation7 + $0x2] sm:$0x1]
        %v284 = vperm.slane %v283, 0
        %v285 = vadd.f32 %v282, %v284
        %286 = vst.msk [vmem:[%s218] sm:$0xff] %vm250, %v285
        %s287 = sand.u32 %s97, 1
        %s288 = scalar_lea.sflag [#allocation4], %s287
        %s289 = sand.u32 %s97, 1
        %s290 = smul.addr %s289, 8
        %s291 = scalar_lea.vmem [#allocation8], %s290
        // Predicated region
        $region45: #{tpu_custom_call.1} parent=31 // pred_check
          %p292 = pneg %p107
        $region46: #{tpu_custom_call.1} parent=31 // pred_check_branch
          %294 = sbr.rel (%p292) target = $region48
        $region47: #{tpu_custom_call.1} parent=31 // pred_region
          %296 = vsyncadd %s288, 0
          %s297 = smul.addr %s21, 8
          %s298 = scalar_lea.hbm %s3, %s297
          %s300 = sshll.u32 %s291, 4
          %s301 = int_to_ptr.vmem [resolvable:$true] %s300
          %s302 = sshll.u32 %s298, 4
          %s303 = int_to_ptr.hbm [resolvable:$true] %s302
          %305 = dma.vmem_to_hbm [thread:$0]  %s301, 128, %s303, %s288
        $region48: #{tpu_custom_call.1} parent=31 // pred_fallthru
          _
      $region32: #{tpu_custom_call.1} parent=5 // pred_fallthru
        _
      %p306 = scmp.le.s32.totalorder 2, %s16
      // Predicated region
      $region49: #{tpu_custom_call.1} parent=5 // pred_check
        %p307 = pneg %p306
      $region50: #{tpu_custom_call.1} parent=5 // pred_check_branch
        %309 = sbr.rel (%p307) target = $region52
      $region51: #{tpu_custom_call.1} parent=5 // pred_region
        %s310 = ssub.s32 %s16, 2
        // Predicated region
        $region53: #{tpu_custom_call.1} parent=51 // pred_check
          %p311 = pneg %p113
        $region54: #{tpu_custom_call.1} parent=51 // pred_check_branch
          %313 = sbr.rel (%p311) target = $region56
        $region55: #{tpu_custom_call.1} parent=51 // pred_region
          %s314 = sand.u32 %s98, 1
          %s315 = scalar_lea.sflag [#allocation4], %s314
          %s316 = sand.u32 %s98, 1
          %s317 = smul.addr %s316, 8
          %s318 = scalar_lea.vmem [#allocation8], %s317
          %320 = dma.done %s315, 128
        $region56: #{tpu_custom_call.1} parent=51 // pred_fallthru
          _
      $region52: #{tpu_custom_call.1} parent=5 // pred_fallthru
        _
    $region6: #{tpu_custom_call.1} parent=1 // loop_footer
      %s20 = sadd.s32 1, %s16
    $region7: #{tpu_custom_call.1} parent=1 // loop_footer_branch
      %15 = sbr.rel target = $region3
    $region8: #{tpu_custom_call.1} parent=1 // loop_exit
      _
    %321 = vsyncpa [#allocation3], 1
    %s322 = scalar_lea.sflag [#allocation3], 1
    %323 = vsyncpa %s322, 1
    %324 = vsyncpa [#allocation6], 1
    %325 = vsyncpa [#allocation4], 1
    %s326 = scalar_lea.sflag [#allocation4], 1
    %327 = vsyncpa %s326, 1

</llo_original>
